<compile_context>
chip_gen: v7x
topology: tpu7x:2x2x1
jax: 0.10.0
libtpu: 0.0.40
codegen_flags: <defaults>
</compile_context>

<pallas_src>
import functools

import jax
import jax.numpy as jnp
import numpy as np
from jax.experimental import pallas as pl
from jax.experimental.pallas import tpu as pltpu


def _round_up(x, m):
    return ((x + m - 1) // m) * m


def _critic_kernel(layer_dims, mean_sizes, obs_ref, *refs):
    """One batch tile of the full Critic MLP forward pass.

    refs = [m_0, ..., m_{P-1}, w_slab_ref, b_slab_ref, out_ref]

    w_slab_ref: (S, DIN_PAD, DOUT_PAD) bf16, slabs in order
                [W0, W1x, W1m_0 .. W1m_{P-1}, W2, ..., W_{L-1}]  (zero padded)
    b_slab_ref: (L, DOUT_PAD) f32, row i = bias of layer i (zero padded)
    """
    num_mean = len(mean_sizes)
    num_layers = len(layer_dims)
    mact_refs = refs[:num_mean]
    w_ref = refs[num_mean]
    b_ref = refs[num_mean + 1]
    out_ref = refs[num_mean + 2]

    bb = b_ref[...]  # (L, DOUT_PAD) f32, VMEM-resident across grid steps

    def weight(slab_idx, din, dout):
        # Static slice of the resident packed-weight slab.
        return w_ref[slab_idx][:din, :dout]

    # ---- layer 0: obs @ W0 + b0, ReLU (bf16 MXU, f32 accumulate) -----------
    din0, dout0 = layer_dims[0]
    x = jnp.dot(obs_ref[...], weight(0, din0, dout0),
                preferred_element_type=jnp.float32)
    x = jnp.maximum(x + bb[0, :dout0][None, :], 0.0)

    # ---- layer 1: concat([x, m_0, ...]) @ W1 + b1 as split matmuls ---------
    hidden0 = dout0
    dout1 = layer_dims[1][1]
    acc = jnp.dot(x.astype(jnp.bfloat16), weight(1, hidden0, dout1),
                  preferred_element_type=jnp.float32)
    for j in range(num_mean):
        acc = acc + jnp.dot(mact_refs[j][...],
                            weight(2 + j, mean_sizes[j], dout1),
                            preferred_element_type=jnp.float32)
    x = acc + bb[1, :dout1][None, :]
    if num_layers > 2:
        x = jnp.maximum(x, 0.0)

    # ---- remaining layers (ReLU on all but the last) ------------------------
    slab = 2 + num_mean
    for i in range(2, num_layers):
        din, dout = layer_dims[i]
        x = jnp.dot(x.astype(jnp.bfloat16), weight(slab, din, dout),
                    preferred_element_type=jnp.float32) + bb[i, :dout][None, :]
        if i < num_layers - 1:
            x = jnp.maximum(x, 0.0)
        slab += 1

    out_ref[...] = x.astype(out_ref.dtype)


def make_layer_dims(observation_size, action_size, mean_action_size, hidden_dims):
    layer_dims = []
    for i in range(len(hidden_dims)):
        if i == 0:
            layer_dims.append([observation_size, hidden_dims[i]])
        elif i == 1:
            layer_dims.append([hidden_dims[i - 1] + mean_action_size, hidden_dims[i]])
        else:
            layer_dims.append([hidden_dims[i - 1], hidden_dims[i]])
    layer_dims.append([hidden_dims[-1], action_size])
    return layer_dims


def init_params(key, layer_dims):
    """Deterministic init mimicking torch.nn.Linear (uniform +-1/sqrt(fan_in))."""
    params = []
    for (din, dout) in layer_dims:
        key, kw, kb = jax.random.split(key, 3)
        bound = 1.0 / np.sqrt(din)
        w = jax.random.uniform(kw, (din, dout), jnp.float32, -bound, bound)
        b = jax.random.uniform(kb, (dout,), jnp.float32, -bound, bound)
        params.append((w, b))
    return params


# Rows per grid step.  512 amortizes per-step overhead and, at these feature
# widths, keeps double-buffered activation tiles far under the 32 MiB scoped /
# 64 MiB physical VMEM of v7x (and trivially under v5e/v6e's 128 MiB).
_TILE_N = 512


def critic_forward(observation, mean_action, params, *, tile_n=_TILE_N,
                   interpret=False):
    """Pallas-backed Critic forward. mean_action is a list of (N, k_i) arrays."""
    n, obs_size = observation.shape
    mean_sizes = tuple(int(m.shape[-1]) for m in mean_action)
    layer_dims = tuple((int(w.shape[0]), int(w.shape[1])) for (w, _) in params)
    num_layers = len(layer_dims)
    hidden0 = layer_dims[0][1]
    action_size = layer_dims[-1][1]
    assert layer_dims[1][0] == hidden0 + sum(mean_sizes), (
        "W1 row count must equal hidden_dims[0] + sum(mean_action sizes)")

    # --- batch tiling --------------------------------------------------------
    tile_n = max(8, min(tile_n, _round_up(n, 8)))
    n_pad = _round_up(n, tile_n)

    def pad_rows(a):
        return jnp.pad(a, ((0, n_pad - n), (0, 0))) if n_pad != n else a

    obs_b = pad_rows(observation.astype(jnp.bfloat16))
    mean_b = [pad_rows(m.astype(jnp.bfloat16)) for m in mean_action]

    # --- pack every weight into ONE bf16 slab, every bias into ONE f32 slab --
    w0, _ = params[0]
    w1, _ = params[1]
    slabs = [w0, w1[:hidden0]]                 # W0, W1x
    off = hidden0
    for k in mean_sizes:                       # W1m_j (rows matching each piece)
        slabs.append(w1[off:off + k])
        off += k
    for (w, _) in params[2:]:
        slabs.append(w)

    din_pad = _round_up(max(w.shape[0] for w in slabs), 16)    # bf16 sublane pack
    dout_pad = _round_up(max(w.shape[1] for w in slabs), 128)  # lane-dense slab
    w_slab = np.zeros((len(slabs), din_pad, dout_pad), np.float32)
    for s, w in enumerate(slabs):
        w_slab[s, :w.shape[0], :w.shape[1]] = np.asarray(w, np.float32)
    w_slab = jnp.asarray(w_slab, jnp.bfloat16)

    b_slab = np.zeros((num_layers, dout_pad), np.float32)
    for i, (_, b) in enumerate(params):
        b_slab[i, :b.shape[0]] = np.asarray(b, np.float32)
    b_slab = jnp.asarray(b_slab)

    # --- specs ---------------------------------------------------------------
    grid = (pl.cdiv(n_pad, tile_n),)

    def act_spec(feat):
        return pl.BlockSpec((tile_n, feat), lambda i: (i, 0))

    in_specs = ([act_spec(obs_size)]
                + [act_spec(k) for k in mean_sizes]
                + [pl.BlockSpec(w_slab.shape, lambda i: (0, 0, 0)),   # resident
                   pl.BlockSpec(b_slab.shape, lambda i: (0, 0))])     # resident
    out_spec = act_spec(action_size)

    flops = 2 * n_pad * sum(din * dout for (din, dout) in layer_dims)
    bytes_accessed = sum(int(a.size) * a.dtype.itemsize
                         for a in [obs_b, *mean_b, w_slab, b_slab])
    bytes_accessed += n_pad * action_size * 4
    cost = pl.CostEstimate(flops=flops, transcendentals=0,
                           bytes_accessed=bytes_accessed)

    kernel = functools.partial(_critic_kernel, layer_dims, mean_sizes)
    out = pl.pallas_call(
        kernel,
        out_shape=jax.ShapeDtypeStruct((n_pad, action_size), jnp.float32),
        grid=grid,
        in_specs=in_specs,
        out_specs=out_spec,
        compiler_params=pltpu.CompilerParams(
            dimension_semantics=("parallel",)),
        cost_estimate=cost,
        interpret=interpret,
    )(obs_b, *mean_b, w_slab, b_slab)
    return out[:n]


def critic_forward_ref(observation, mean_action, params):
    """Pure-JAX reference mirroring the PyTorch forward (same bf16 MXU casts)."""
    def mm(a, w):
        return jnp.dot(a.astype(jnp.bfloat16), w.astype(jnp.bfloat16),
                       preferred_element_type=jnp.float32)

    w0, b0 = params[0]
    x = jax.nn.relu(mm(observation, w0) + b0)
    x = jnp.concatenate([x] + list(mean_action), axis=-1)
    for i in range(1, len(params)):
        w, b = params[i]
        x = mm(x, w) + b
        if i < len(params) - 1:
            x = jax.nn.relu(x)
    return x


if __name__ == "__main__":
    # Small, forward-consistent shapes.
    batch = 8
    observation_size = 32
    action_size = 6
    mean_action_sizes = [4, 4]            # two mean-action types
    hidden_dims = [32, 16]

    layer_dims = make_layer_dims(observation_size, action_size,
                                 sum(mean_action_sizes), hidden_dims)

    key = jax.random.PRNGKey(0)
    key, kobs, kp = jax.random.split(key, 3)
    observation = jax.random.normal(kobs, (batch, observation_size), jnp.float32)
    mean_action = []
    for k in mean_action_sizes:
        key, km = jax.random.split(key)
        mean_action.append(jax.random.normal(km, (batch, k), jnp.float32))

    params = init_params(kp, layer_dims)

    out = critic_forward(observation, mean_action, params)
    out = jax.block_until_ready(out)

    ref = critic_forward_ref(observation, mean_action, params)
    assert out.shape == (batch, action_size)
    np.testing.assert_allclose(np.asarray(out), np.asarray(ref),
                               rtol=1e-4, atol=1e-4)
    print("KERNEL_OK")
</pallas_src>

<mosaic_0001>
module attributes {stable_mosaic.version = 11 : i64} {
  func.func @_critic_kernel(%arg0: i32, %arg1: memref<8x32xbf16, #tpu.memory_space<vmem>>, %arg2: memref<8x4xbf16, #tpu.memory_space<vmem>>, %arg3: memref<8x4xbf16, #tpu.memory_space<vmem>>, %arg4: memref<5x32x128xbf16, #tpu.memory_space<vmem>>, %arg5: memref<3x128xf32, #tpu.memory_space<vmem>>, %arg6: memref<8x6xf32, #tpu.memory_space<vmem>>) attributes {dimension_semantics = [#tpu.dimension_semantics<parallel>], iteration_bounds = array<i64: 1>, scalar_prefetch = 0 : i64, scratch_operands = 0 : i64, tpu.core_type = #tpu.core_type<tc>, window_params = [{transform_indices = @transform_0, window_bounds = array<i64: 8, 32>}, {transform_indices = @transform_1, window_bounds = array<i64: 8, 4>}, {transform_indices = @transform_2, window_bounds = array<i64: 8, 4>}, {pipeline_mode = #tpu.pipeline_mode<synchronous>, transform_indices = @transform_3, window_bounds = array<i64: 5, 32, 128>}, {pipeline_mode = #tpu.pipeline_mode<synchronous>, transform_indices = @transform_4, window_bounds = array<i64: 3, 128>}, {transform_indices = @transform_5, window_bounds = array<i64: 8, 6>}]} {
    %c0 = arith.constant 0 : index
    %c0_0 = arith.constant 0 : index
    %0 = vector.load %arg5[%c0, %c0_0] : memref<3x128xf32, #tpu.memory_space<vmem>>, vector<3x128xf32>
    %c0_1 = arith.constant 0 : index
    %c0_2 = arith.constant 0 : index
    %1 = vector.load %arg1[%c0_1, %c0_2] : memref<8x32xbf16, #tpu.memory_space<vmem>>, vector<8x32xbf16>
    %c0_3 = arith.constant 0 : index
    %c0_4 = arith.constant 0 : index
    %c0_5 = arith.constant 0 : index
    %2 = vector.load %arg4[%c0_3, %c0_4, %c0_5] : memref<5x32x128xbf16, #tpu.memory_space<vmem>>, vector<1x32x128xbf16>
    %3 = vector.shape_cast %2 : vector<1x32x128xbf16> to vector<32x128xbf16>
    %4 = vector.extract_strided_slice %3 {offsets = [0, 0], sizes = [32, 32], strides = [1, 1]} : vector<32x128xbf16> to vector<32x32xbf16>
    %cst = arith.constant dense<0.000000e+00> : vector<8x32xf32>
    %5 = tpu.matmul %1, %4, %cst {dimension_numbers = #tpu.dot_dimension_numbers<[1], [0], [0], [1], [0, 0, 1, 1], [], []>} : vector<8x32xbf16>, vector<32x32xbf16>, vector<8x32xf32> -> vector<8x32xf32>
    %6 = vector.extract_strided_slice %0 {offsets = [0, 0], sizes = [1, 32], strides = [1, 1]} : vector<3x128xf32> to vector<1x32xf32>
    %7 = vector.shape_cast %6 : vector<1x32xf32> to vector<32xf32>
    %8 = vector.shape_cast %7 : vector<32xf32> to vector<1x32xf32>
    %9 = vector.broadcast %8 : vector<1x32xf32> to vector<8x32xf32>
    %10 = arith.addf %5, %9 : vector<8x32xf32>
    %cst_6 = arith.constant 0.000000e+00 : f32
    %11 = vector.broadcast %cst_6 : f32 to vector<8x32xf32>
    %12 = arith.maximumf %10, %11 : vector<8x32xf32>
    %13 = arith.truncf %12 : vector<8x32xf32> to vector<8x32xbf16>
    %c1 = arith.constant 1 : index
    %c0_7 = arith.constant 0 : index
    %c0_8 = arith.constant 0 : index
    %14 = vector.load %arg4[%c1, %c0_7, %c0_8] : memref<5x32x128xbf16, #tpu.memory_space<vmem>>, vector<1x32x128xbf16>
    %15 = vector.shape_cast %14 : vector<1x32x128xbf16> to vector<32x128xbf16>
    %16 = vector.extract_strided_slice %15 {offsets = [0, 0], sizes = [32, 16], strides = [1, 1]} : vector<32x128xbf16> to vector<32x16xbf16>
    %cst_9 = arith.constant dense<0.000000e+00> : vector<8x16xf32>
    %17 = tpu.matmul %13, %16, %cst_9 {dimension_numbers = #tpu.dot_dimension_numbers<[1], [0], [0], [1], [0, 0, 1, 1], [], []>} : vector<8x32xbf16>, vector<32x16xbf16>, vector<8x16xf32> -> vector<8x16xf32>
    %c0_10 = arith.constant 0 : index
    %c0_11 = arith.constant 0 : index
    %18 = vector.load %arg2[%c0_10, %c0_11] : memref<8x4xbf16, #tpu.memory_space<vmem>>, vector<8x4xbf16>
    %c2 = arith.constant 2 : index
    %c0_12 = arith.constant 0 : index
    %c0_13 = arith.constant 0 : index
    %19 = vector.load %arg4[%c2, %c0_12, %c0_13] : memref<5x32x128xbf16, #tpu.memory_space<vmem>>, vector<1x32x128xbf16>
    %20 = vector.shape_cast %19 : vector<1x32x128xbf16> to vector<32x128xbf16>
    %21 = vector.extract_strided_slice %20 {offsets = [0, 0], sizes = [4, 16], strides = [1, 1]} : vector<32x128xbf16> to vector<4x16xbf16>
    %cst_14 = arith.constant dense<0.000000e+00> : vector<8x16xf32>
    %22 = tpu.matmul %18, %21, %cst_14 {dimension_numbers = #tpu.dot_dimension_numbers<[1], [0], [0], [1], [0, 0, 1, 1], [], []>} : vector<8x4xbf16>, vector<4x16xbf16>, vector<8x16xf32> -> vector<8x16xf32>
    %23 = arith.addf %17, %22 : vector<8x16xf32>
    %c0_15 = arith.constant 0 : index
    %c0_16 = arith.constant 0 : index
    %24 = vector.load %arg3[%c0_15, %c0_16] : memref<8x4xbf16, #tpu.memory_space<vmem>>, vector<8x4xbf16>
    %c3 = arith.constant 3 : index
    %c0_17 = arith.constant 0 : index
    %c0_18 = arith.constant 0 : index
    %25 = vector.load %arg4[%c3, %c0_17, %c0_18] : memref<5x32x128xbf16, #tpu.memory_space<vmem>>, vector<1x32x128xbf16>
    %26 = vector.shape_cast %25 : vector<1x32x128xbf16> to vector<32x128xbf16>
    %27 = vector.extract_strided_slice %26 {offsets = [0, 0], sizes = [4, 16], strides = [1, 1]} : vector<32x128xbf16> to vector<4x16xbf16>
    %cst_19 = arith.constant dense<0.000000e+00> : vector<8x16xf32>
    %28 = tpu.matmul %24, %27, %cst_19 {dimension_numbers = #tpu.dot_dimension_numbers<[1], [0], [0], [1], [0, 0, 1, 1], [], []>} : vector<8x4xbf16>, vector<4x16xbf16>, vector<8x16xf32> -> vector<8x16xf32>
    %29 = arith.addf %23, %28 : vector<8x16xf32>
    %30 = vector.extract_strided_slice %0 {offsets = [1, 0], sizes = [1, 16], strides = [1, 1]} : vector<3x128xf32> to vector<1x16xf32>
    %31 = vector.shape_cast %30 : vector<1x16xf32> to vector<16xf32>
    %32 = vector.shape_cast %31 : vector<16xf32> to vector<1x16xf32>
    %33 = vector.broadcast %32 : vector<1x16xf32> to vector<8x16xf32>
    %34 = arith.addf %29, %33 : vector<8x16xf32>
    %cst_20 = arith.constant 0.000000e+00 : f32
    %35 = vector.broadcast %cst_20 : f32 to vector<8x16xf32>
    %36 = arith.maximumf %34, %35 : vector<8x16xf32>
    %37 = arith.truncf %36 : vector<8x16xf32> to vector<8x16xbf16>
    %c4 = arith.constant 4 : index
    %c0_21 = arith.constant 0 : index
    %c0_22 = arith.constant 0 : index
    %38 = vector.load %arg4[%c4, %c0_21, %c0_22] : memref<5x32x128xbf16, #tpu.memory_space<vmem>>, vector<1x32x128xbf16>
    %39 = vector.shape_cast %38 : vector<1x32x128xbf16> to vector<32x128xbf16>
    %40 = vector.extract_strided_slice %39 {offsets = [0, 0], sizes = [16, 6], strides = [1, 1]} : vector<32x128xbf16> to vector<16x6xbf16>
    %cst_23 = arith.constant dense<0.000000e+00> : vector<8x6xf32>
    %41 = tpu.matmul %37, %40, %cst_23 {dimension_numbers = #tpu.dot_dimension_numbers<[1], [0], [0], [1], [0, 0, 1, 1], [], []>} : vector<8x16xbf16>, vector<16x6xbf16>, vector<8x6xf32> -> vector<8x6xf32>
    %42 = vector.extract_strided_slice %0 {offsets = [2, 0], sizes = [1, 6], strides = [1, 1]} : vector<3x128xf32> to vector<1x6xf32>
    %43 = vector.shape_cast %42 : vector<1x6xf32> to vector<6xf32>
    %44 = vector.shape_cast %43 : vector<6xf32> to vector<1x6xf32>
    %45 = vector.broadcast %44 : vector<1x6xf32> to vector<8x6xf32>
    %46 = arith.addf %41, %45 : vector<8x6xf32>
    %c0_24 = arith.constant 0 : index
    %c0_25 = arith.constant 0 : index
    %47 = vector.load %arg6[%c0_24, %c0_25] : memref<8x6xf32, #tpu.memory_space<vmem>>, vector<8x6xf32>
    tpu.vector_store %arg6[%c0_24, %c0_25], %46 {strides = array<i32>} : memref<8x6xf32, #tpu.memory_space<vmem>>, vector<8x6xf32>,
    return
  }
  func.func @transform_0(%arg0: i32) -> (i32, i32) {
    %c0_i32 = arith.constant 0 : i32
    %c0_i32_0 = arith.constant 0 : i32
    return %arg0, %c0_i32 : i32, i32
  }
  func.func @transform_1(%arg0: i32) -> (i32, i32) {
    %c0_i32 = arith.constant 0 : i32
    %c0_i32_0 = arith.constant 0 : i32
    return %arg0, %c0_i32 : i32, i32
  }
  func.func @transform_2(%arg0: i32) -> (i32, i32) {
    %c0_i32 = arith.constant 0 : i32
    %c0_i32_0 = arith.constant 0 : i32
    return %arg0, %c0_i32 : i32, i32
  }
  func.func @transform_3(%arg0: i32) -> (i32, i32, i32) {
    %c0_i32 = arith.constant 0 : i32
    %c0_i32_0 = arith.constant 0 : i32
    %c0_i32_1 = arith.constant 0 : i32
    %c0_i32_2 = arith.constant 0 : i32
    return %c0_i32, %c0_i32_0, %c0_i32_1 : i32, i32, i32
  }
  func.func @transform_4(%arg0: i32) -> (i32, i32) {
    %c0_i32 = arith.constant 0 : i32
    %c0_i32_0 = arith.constant 0 : i32
    %c0_i32_1 = arith.constant 0 : i32
    return %c0_i32, %c0_i32_0 : i32, i32
  }
  func.func @transform_5(%arg0: i32) -> (i32, i32) {
    %c0_i32 = arith.constant 0 : i32
    %c0_i32_0 = arith.constant 0 : i32
    return %arg0, %c0_i32 : i32, i32
  }
}

</mosaic_0001>

<llo_original>
// kernel: tpu_custom_call.1
$region0: #{tpu_custom_call.1}
  #allocation0 [shape = 'u32[]', space=smem, size = 0x4, offset = 0x4, fixed_abs, tag = 'smem constant byte address 0x4 - core index']
  #allocation1 [shape = 'u32[144,128]{1,0:T(1,128)}', space=vmem, size = 0x12000, scoped, tag = 'internal scratch']
  %s0 = inlined_call_operand.vmem [shape: bf16[8,32], index: 0, kind: input, shape index: {}]
  %s1 = inlined_call_operand.vmem [shape: bf16[8,4], index: 1, kind: input, shape index: {}]
  %s2 = inlined_call_operand.vmem [shape: bf16[8,4], index: 2, kind: input, shape index: {}]
  %s3 = inlined_call_operand.hbm [shape: bf16[5,32,128], index: 3, kind: input, shape index: {}]
  %s4 = inlined_call_operand.vmem [shape: f32[3,128], index: 4, kind: input, shape index: {}]
  %s5 = inlined_call_operand.hbm [shape: f32[8,6], index: 5, kind: output, shape index: {}]
  %s6 = sld [smem:[#allocation0]]
  $region34: #{tpu_custom_call.1} parent=0
    _
  %s8 = ssub.s32 1, %s6
  %s9 = scalar_select 0, %s8, %s6
  $region1: #{tpu_custom_call.1} parent=0
    #allocation2 [shape = 'u8[40960]{0}', space=vmem, size = 0xa000, scoped, tag = 'input window, operand 3, single buffered']
    #allocation3 [shape = 's32[1]{0}', space=sflag, size = 0x4, scoped, tag = 'scoped memory for tpu_custom_call.1']
    #allocation4 [shape = 's32[1]{0}', space=sflag, size = 0x4, scoped, tag = 'scoped memory for tpu_custom_call.1']
    #allocation5 [shape = 'u8[4096]{0}', space=vmem, size = 0x1000, scoped, tag = 'output window, operand 0, single buffered']
    %10 = vsyncpa [#allocation3], 0
    %11 = vsyncpa [#allocation4], 0
    // Predicated region
    $region2: #{tpu_custom_call.1} parent=1 // pred_check
      _
    $region3: #{tpu_custom_call.1} parent=1 // pred_check_branch
      %13 = sbr.rel (0) target = $region5
    $region4: #{tpu_custom_call.1} parent=1 // pred_region
      _
    $region5: #{tpu_custom_call.1} parent=1 // pred_fallthru
      _
    // Predicated region
    $region6: #{tpu_custom_call.1} parent=1 // pred_check
      _
    $region7: #{tpu_custom_call.1} parent=1 // pred_check_branch
      %15 = sbr.rel (0) target = $region9
    $region8: #{tpu_custom_call.1} parent=1 // pred_region
      _
    $region9: #{tpu_custom_call.1} parent=1 // pred_fallthru
      _
    // Predicated region
    $region10: #{tpu_custom_call.1} parent=1 // pred_check
      _
    $region11: #{tpu_custom_call.1} parent=1 // pred_check_branch
      %17 = sbr.rel (0) target = $region13
    $region12: #{tpu_custom_call.1} parent=1 // pred_region
      _
    $region13: #{tpu_custom_call.1} parent=1 // pred_fallthru
      _
    // Predicated region
    $region14: #{tpu_custom_call.1} parent=1 // pred_check
      _
    $region15: #{tpu_custom_call.1} parent=1 // pred_check_branch
      %19 = sbr.rel (0) target = $region17
    $region16: #{tpu_custom_call.1} parent=1 // pred_region
      %s21 = ssub.s32 1280, 1280
      %22 = vsyncadd [#allocation3], %s21
      %s23 = sshll.u32 [#allocation2], 4
      %s24 = int_to_ptr.vmem [resolvable:$true] %s23
      %29 = dma.hbm_to_vmem [thread:$0]  %s3, 1280, %s24, [#allocation3], 64, 64, 4
    $region17: #{tpu_custom_call.1} parent=1 // pred_fallthru
      _
    // Predicated region
    $region18: #{tpu_custom_call.1} parent=1 // pred_check
      _
    $region19: #{tpu_custom_call.1} parent=1 // pred_check_branch
      %31 = sbr.rel (0) target = $region21
    $region20: #{tpu_custom_call.1} parent=1 // pred_region
      _
    $region21: #{tpu_custom_call.1} parent=1 // pred_fallthru
      _
    // Predicated region
    $region22: #{tpu_custom_call.1} parent=1 // pred_check
      _
    $region23: #{tpu_custom_call.1} parent=1 // pred_check_branch
      %33 = sbr.rel (0) target = $region25
    $region24: #{tpu_custom_call.1} parent=1 // pred_region
      %34 = dma.done [#allocation3], 1280
    $region25: #{tpu_custom_call.1} parent=1 // pred_fallthru
      _
    %v36 = vld [vmem:[%s4] sm:$0x7]
    %v37 = vld [vmem:[%s0] sm:$0xf]
    %v38 = vld [vmem:[#allocation2] sm:$0xf]
    %v39 = vld [vmem:[#allocation2 + $0x4] sm:$0xf]
    %v40 = vld [vmem:[#allocation2 + $0x8] sm:$0xf]
    %v41 = vld [vmem:[#allocation2 + $0xc] sm:$0xf]
    %v42 = vlaneseq
    %v43 = vshrl.u32 %v42, 7
    %v44 = vsub.s32 0, %v43
    %v45 = vrot.slane %v36, %v44
    %v50 = vunpack.c.l.b16 %v38
    %v51 = vunpack.c.l.b16 %v39
    %v52 = vunpack.c.l.b16 %v40
    %v53 = vunpack.c.l.b16 %v41
    %v54 = vpack.c.b16 %v51, %v50
    %v55 = vpack.c.b16 %v53, %v52
    %vm58 = vcmask 261120
    %v60 = vsel %vm58, %v37, 0
    %62 = vmatprep.subr.bf16.mxu0 0
    %63 = vmatpush1.bf16.msra.mxu0 %v54
    %64 = vmatprep.subr.bf16.mxu0 0
    %65 = vmatpush1.bf16.msra.mxu0 %v55
    %66 = vmatprep.subr.bf16.mxu0 0
    %67 = vmatpush1.bf16.msra.mxu0 0
    %68 = vmatprep.subr.bf16.mxu0 0
    %69 = vmatpush1.bf16.msra.mxu0 0
    %70 = vmatprep.subr.bf16.mxu0 0
    %71 = vmatpush1.bf16.msra.mxu0 0
    %72 = vmatprep.subr.bf16.mxu0 0
    %73 = vmatpush1.bf16.msra.mxu0 0
    %74 = vmatprep.subr.bf16.mxu0 0
    %75 = vmatpush1.bf16.msra.mxu0 0
    %76 = vmatprep.subr.bf16.mxu0 0
    %77 = vmatpush1.bf16.msra.mxu0 0
    %78 = vmatprep.subr.bf16.mxu0 0
    %79 = vmatpush1.bf16.msra.mxu0 0
    %80 = vmatprep.subr.bf16.mxu0 0
    %81 = vmatpush1.bf16.msra.mxu0 0
    %82 = vmatprep.subr.bf16.mxu0 0
    %83 = vmatpush1.bf16.msra.mxu0 0
    %84 = vmatprep.subr.bf16.mxu0 0
    %85 = vmatpush1.bf16.msra.mxu0 0
    %86 = vmatprep.subr.bf16.mxu0 0
    %87 = vmatpush1.bf16.msra.mxu0 0
    %88 = vmatprep.subr.bf16.mxu0 0
    %89 = vmatpush1.bf16.msra.mxu0 0
    %90 = vmatprep.subr.bf16.mxu0 0
    %91 = vmatpush1.bf16.msra.mxu0 0
    %92 = vmatprep.subr.bf16.mxu0 0
    %93 = vmatpush1.bf16.msra.mxu0 0
    %94 = vmatprep.mubr.bf16.mxu0 0
    %95 = vmatmul.mubr.bf16.gmra.mrb[0].mxu0 %v60
    %v96 = vpop.f32.mrb[0].mxu0
    %v97 = vadd.f32 %v45, %v96
    %v98 = vpop.f32.mrb[0].mxu0
    %v99 = vpop.f32.mrb[0].mxu0
    %v100 = vpop.f32.mrb[0].mxu0
    %101 = vdwg.mxu0
    %v102 = vmax.f32 %v97, 0.0
    %v103 = vpack.c.bf16 %v102, %v102
    %s104 = scalar_lea.vmem [#allocation2], 16
    %v105 = vld [vmem:[%s104] sm:$0xf]
    %v106 = vld [vmem:[%s104 + $0x4] sm:$0xf]
    %v107 = vld [vmem:[%s104 + $0x8] sm:$0xf]
    %v108 = vld [vmem:[%s104 + $0xc] sm:$0xf]
    %v109 = vld [vmem:[%s1] sm:$0xf]
    %s110 = scalar_lea.vmem [#allocation2], 32
    %v111 = vld [vmem:[%s110] sm:$0xf]
    %vm112 = vcmask 31744
    %v114 = vsel %vm112, %v109, 0
    %vm116 = vcmask 1041408
    %v118 = vsel %vm116, %v111, 0
    %120 = vmatprep.subr.bf16.mxu0 0
    %121 = vmatpush1.bf16.msra.mxu0 %v118
    %122 = vmatprep.subr.bf16.mxu0 0
    %123 = vmatpush1.bf16.msra.mxu0 0
    %124 = vmatprep.subr.bf16.mxu0 0
    %125 = vmatpush1.bf16.msra.mxu0 0
    %126 = vmatprep.subr.bf16.mxu0 0
    %127 = vmatpush1.bf16.msra.mxu0 0
    %128 = vmatprep.subr.bf16.mxu0 0
    %129 = vmatpush1.bf16.msra.mxu0 0
    %130 = vmatprep.subr.bf16.mxu0 0
    %131 = vmatpush1.bf16.msra.mxu0 0
    %132 = vmatprep.subr.bf16.mxu0 0
    %133 = vmatpush1.bf16.msra.mxu0 0
    %134 = vmatprep.subr.bf16.mxu0 0
    %135 = vmatpush1.bf16.msra.mxu0 0
    %136 = vmatprep.subr.bf16.mxu0 0
    %137 = vmatpush1.bf16.msra.mxu0 0
    %138 = vmatprep.subr.bf16.mxu0 0
    %139 = vmatpush1.bf16.msra.mxu0 0
    %140 = vmatprep.subr.bf16.mxu0 0
    %141 = vmatpush1.bf16.msra.mxu0 0
    %142 = vmatprep.subr.bf16.mxu0 0
    %143 = vmatpush1.bf16.msra.mxu0 0
    %144 = vmatprep.subr.bf16.mxu0 0
    %145 = vmatpush1.bf16.msra.mxu0 0
    %146 = vmatprep.subr.bf16.mxu0 0
    %147 = vmatpush1.bf16.msra.mxu0 0
    %148 = vmatprep.subr.bf16.mxu0 0
    %149 = vmatpush1.bf16.msra.mxu0 0
    %150 = vmatprep.subr.bf16.mxu0 0
    %151 = vmatpush1.bf16.msra.mxu0 0
    %152 = vmatprep.mubr.bf16.mxu0 0
    %153 = vmatmul.mubr.bf16.gmra.mrb[0].mxu0 %v114
    %v154 = vpop.f32.mrb[0].mxu0
    %v155 = vadd.f32 0.0, %v154
    %v156 = vpop.f32.mrb[0].mxu0
    %v157 = vpop.f32.mrb[0].mxu0
    %v158 = vpop.f32.mrb[0].mxu0
    %159 = vdwg.mxu0
    %v164 = vunpack.c.l.b16 %v105
    %v165 = vunpack.c.l.b16 %v106
    %v166 = vunpack.c.l.b16 %v107
    %v167 = vunpack.c.l.b16 %v108
    %v168 = vpack.c.b16 %v165, %v164
    %v169 = vpack.c.b16 %v167, %v166
    %v173 = vsel %vm58, %v103, 0
    %175 = vmatprep.subr.bf16.mxu0 0
    %176 = vmatpush1.bf16.msra.mxu0 %v168
    %177 = vmatprep.subr.bf16.mxu0 0
    %178 = vmatpush1.bf16.msra.mxu0 %v169
    %179 = vmatprep.subr.bf16.mxu0 0
    %180 = vmatpush1.bf16.msra.mxu0 0
    %181 = vmatprep.subr.bf16.mxu0 0
    %182 = vmatpush1.bf16.msra.mxu0 0
    %183 = vmatprep.subr.bf16.mxu0 0
    %184 = vmatpush1.bf16.msra.mxu0 0
    %185 = vmatprep.subr.bf16.mxu0 0
    %186 = vmatpush1.bf16.msra.mxu0 0
    %187 = vmatprep.subr.bf16.mxu0 0
    %188 = vmatpush1.bf16.msra.mxu0 0
    %189 = vmatprep.subr.bf16.mxu0 0
    %190 = vmatpush1.bf16.msra.mxu0 0
    %191 = vmatprep.subr.bf16.mxu0 0
    %192 = vmatpush1.bf16.msra.mxu0 0
    %193 = vmatprep.subr.bf16.mxu0 0
    %194 = vmatpush1.bf16.msra.mxu0 0
    %195 = vmatprep.subr.bf16.mxu0 0
    %196 = vmatpush1.bf16.msra.mxu0 0
    %197 = vmatprep.subr.bf16.mxu0 0
    %198 = vmatpush1.bf16.msra.mxu0 0
    %199 = vmatprep.subr.bf16.mxu0 0
    %200 = vmatpush1.bf16.msra.mxu0 0
    %201 = vmatprep.subr.bf16.mxu0 0
    %202 = vmatpush1.bf16.msra.mxu0 0
    %203 = vmatprep.subr.bf16.mxu0 0
    %204 = vmatpush1.bf16.msra.mxu0 0
    %205 = vmatprep.subr.bf16.mxu0 0
    %206 = vmatpush1.bf16.msra.mxu0 0
    %207 = vmatprep.mubr.bf16.mxu0 0
    %208 = vmatmul.mubr.bf16.gmra.mrb[0].mxu0 %v173
    %v209 = vpop.f32.mrb[0].mxu0
    %v210 = vadd.f32 %v155, %v209
    %v211 = vpop.f32.mrb[0].mxu0
    %v212 = vpop.f32.mrb[0].mxu0
    %v213 = vpop.f32.mrb[0].mxu0
    %214 = vdwg.mxu0
    %v215 = vld [vmem:[%s2] sm:$0xf]
    %s216 = scalar_lea.vmem [#allocation2], 48
    %v217 = vld [vmem:[%s216] sm:$0xf]
    %v219 = vsel %vm112, %v215, 0
    %v222 = vsel %vm116, %v217, 0
    %224 = vmatprep.subr.bf16.mxu0 0
    %225 = vmatpush1.bf16.msra.mxu0 %v222
    %226 = vmatprep.subr.bf16.mxu0 0
    %227 = vmatpush1.bf16.msra.mxu0 0
    %228 = vmatprep.subr.bf16.mxu0 0
    %229 = vmatpush1.bf16.msra.mxu0 0
    %230 = vmatprep.subr.bf16.mxu0 0
    %231 = vmatpush1.bf16.msra.mxu0 0
    %232 = vmatprep.subr.bf16.mxu0 0
    %233 = vmatpush1.bf16.msra.mxu0 0
    %234 = vmatprep.subr.bf16.mxu0 0
    %235 = vmatpush1.bf16.msra.mxu0 0
    %236 = vmatprep.subr.bf16.mxu0 0
    %237 = vmatpush1.bf16.msra.mxu0 0
    %238 = vmatprep.subr.bf16.mxu0 0
    %239 = vmatpush1.bf16.msra.mxu0 0
    %240 = vmatprep.subr.bf16.mxu0 0
    %241 = vmatpush1.bf16.msra.mxu0 0
    %242 = vmatprep.subr.bf16.mxu0 0
    %243 = vmatpush1.bf16.msra.mxu0 0
    %244 = vmatprep.subr.bf16.mxu0 0
    %245 = vmatpush1.bf16.msra.mxu0 0
    %246 = vmatprep.subr.bf16.mxu0 0
    %247 = vmatpush1.bf16.msra.mxu0 0
    %248 = vmatprep.subr.bf16.mxu0 0
    %249 = vmatpush1.bf16.msra.mxu0 0
    %250 = vmatprep.subr.bf16.mxu0 0
    %251 = vmatpush1.bf16.msra.mxu0 0
    %252 = vmatprep.subr.bf16.mxu0 0
    %253 = vmatpush1.bf16.msra.mxu0 0
    %254 = vmatprep.subr.bf16.mxu0 0
    %255 = vmatpush1.bf16.msra.mxu0 0
    %256 = vmatprep.mubr.bf16.mxu0 0
    %257 = vmatmul.mubr.bf16.gmra.mrb[0].mxu0 %v219
    %v258 = vpop.f32.mrb[0].mxu0
    %v259 = vadd.f32 0.0, %v258
    %v260 = vpop.f32.mrb[0].mxu0
    %v261 = vpop.f32.mrb[0].mxu0
    %v262 = vpop.f32.mrb[0].mxu0
    %263 = vdwg.mxu0
    %v264 = vadd.f32 %v210, %v259
    %v265 = vlaneseq
    %v266 = vshrl.u32 %v265, 7
    %v267 = vsub.s32 1, %v266
    %v268 = vrot.slane %v36, %v267
    %v269 = vadd.f32 %v264, %v268
    %v270 = vmax.f32 %v269, 0.0
    %v271 = vpack.c.bf16 %v270, %v270
    %s272 = scalar_lea.vmem [#allocation2], 64
    %v273 = vld [vmem:[%s272] sm:$0xf]
    %v274 = vld [vmem:[%s272 + $0x4] sm:$0xf]
    %v275 = vlaneseq
    %v276 = vshrl.u32 %v275, 7
    %v277 = vsub.s32 2, %v276
    %v278 = vrot.slane %v36, %v277
    %v281 = vunpack.c.l.b16 %v273
    %v282 = vunpack.c.l.b16 %v274
    %v283 = vpack.c.b16 %v282, %v281
    %vm285 = vcmask 130048
    %v287 = vsel %vm285, %v271, 0
    %289 = vmatprep.subr.bf16.mxu0 0
    %290 = vmatpush1.bf16.msra.mxu0 %v283
    %291 = vmatprep.subr.bf16.mxu0 0
    %292 = vmatpush1.bf16.msra.mxu0 0
    %293 = vmatprep.subr.bf16.mxu0 0
    %294 = vmatpush1.bf16.msra.mxu0 0
    %295 = vmatprep.subr.bf16.mxu0 0
    %296 = vmatpush1.bf16.msra.mxu0 0
    %297 = vmatprep.subr.bf16.mxu0 0
    %298 = vmatpush1.bf16.msra.mxu0 0
    %299 = vmatprep.subr.bf16.mxu0 0
    %300 = vmatpush1.bf16.msra.mxu0 0
    %301 = vmatprep.subr.bf16.mxu0 0
    %302 = vmatpush1.bf16.msra.mxu0 0
    %303 = vmatprep.subr.bf16.mxu0 0
    %304 = vmatpush1.bf16.msra.mxu0 0
    %305 = vmatprep.subr.bf16.mxu0 0
    %306 = vmatpush1.bf16.msra.mxu0 0
    %307 = vmatprep.subr.bf16.mxu0 0
    %308 = vmatpush1.bf16.msra.mxu0 0
    %309 = vmatprep.subr.bf16.mxu0 0
    %310 = vmatpush1.bf16.msra.mxu0 0
    %311 = vmatprep.subr.bf16.mxu0 0
    %312 = vmatpush1.bf16.msra.mxu0 0
    %313 = vmatprep.subr.bf16.mxu0 0
    %314 = vmatpush1.bf16.msra.mxu0 0
    %315 = vmatprep.subr.bf16.mxu0 0
    %316 = vmatpush1.bf16.msra.mxu0 0
    %317 = vmatprep.subr.bf16.mxu0 0
    %318 = vmatpush1.bf16.msra.mxu0 0
    %319 = vmatprep.subr.bf16.mxu0 0
    %320 = vmatpush1.bf16.msra.mxu0 0
    %321 = vmatprep.mubr.bf16.mxu0 0
    %322 = vmatmul.mubr.bf16.gmra.mrb[0].mxu0 %v287
    %v323 = vpop.f32.mrb[0].mxu0
    %v324 = vadd.f32 %v278, %v323
    %v325 = vpop.f32.mrb[0].mxu0
    %v326 = vpop.f32.mrb[0].mxu0
    %v327 = vpop.f32.mrb[0].mxu0
    %328 = vdwg.mxu0
    %vm329 = vcmask 48128
    %330 = vst.msk [vmem:[#allocation5] sm:$0xff] %vm329, %v324
    // Predicated region
    $region26: #{tpu_custom_call.1} parent=1 // pred_check
      _
    $region27: #{tpu_custom_call.1} parent=1 // pred_check_branch
      %332 = sbr.rel (0) target = $region29
    $region28: #{tpu_custom_call.1} parent=1 // pred_region
      %s334 = ssub.s32 128, 128
      %335 = vsyncadd [#allocation4], %s334
      %s337 = sshll.u32 [#allocation5], 4
      %s338 = int_to_ptr.vmem [resolvable:$true] %s337
      %340 = dma.vmem_to_hbm [thread:$0]  %s338, 128, %s5, [#allocation4]
    $region29: #{tpu_custom_call.1} parent=1 // pred_fallthru
      _
    // Predicated region
    $region30: #{tpu_custom_call.1} parent=1 // pred_check
      _
    $region31: #{tpu_custom_call.1} parent=1 // pred_check_branch
      %342 = sbr.rel (0) target = $region33
    $region32: #{tpu_custom_call.1} parent=1 // pred_region
      %343 = dma.done [#allocation4], 128
    $region33: #{tpu_custom_call.1} parent=1 // pred_fallthru
      _
    %344 = vsyncpa [#allocation3], 1
    %345 = vsyncpa [#allocation4], 1

</llo_original>
